<compile_context>
chip_gen: v7x
topology: tpu7x:2x2x1
jax: 0.10.0
libtpu: 0.0.40
codegen_flags: <defaults>
</compile_context>

<pallas_src>
import functools

import jax
import jax.numpy as jnp
from jax.experimental import pallas as pl
from jax.experimental.pallas import tpu as pltpu


def _round_up(a, b):
    return ((a + b - 1) // b) * b


def _dense_sage_kernel(adj_ref, h_ref, out_ref, acc_ref, deg_ref, *, self_loop):
    """One (row-tile i, col-tile k) step of out = (adj @ h) / clamp(deg, 1)."""
    i = pl.program_id(0)
    k = pl.program_id(1)

    @pl.when(k == 0)
    def _init():
        acc_ref[...] = jnp.zeros_like(acc_ref)
        deg_ref[...] = jnp.zeros_like(deg_ref)

    adj = adj_ref[...]
    if self_loop:
        # Self-loop entries only live on diagonal tiles (TILE_M == TILE_K, so
        # that is exactly i == k); the scalar gate folds the mask to a no-op
        # select on off-diagonal tiles.
        tm, tk = adj.shape
        row = jax.lax.broadcasted_iota(jnp.int32, (tm, tk), 0)
        col = jax.lax.broadcasted_iota(jnp.int32, (tm, tk), 1)
        on_diag = jnp.logical_and(row == col, i == k)
        adj = jnp.where(on_diag, jnp.zeros_like(adj), adj)

    # Degree accumulates in f32 regardless of the streaming dtype.
    deg_ref[...] += jnp.sum(adj.astype(jnp.float32), axis=-1, keepdims=True)

    # MXU matmul with f32 accumulation into persistent scratch.
    acc_ref[...] += jnp.dot(adj, h_ref[...], preferred_element_type=jnp.float32)

    @pl.when(k == pl.num_programs(1) - 1)
    def _finalize():
        deg = jnp.maximum(deg_ref[...], 1.0)  # clamp(min=1)
        inv = pl.reciprocal(deg, approx=True)  # EUP, off the VPU critical path
        out_ref[...] = (acc_ref[...] * inv).astype(out_ref.dtype)


def dense_sage_conv(x, adj, weight=None, *, has_weight=True, self_loop=True,
                    tile=256, matmul_dtype=None):
    """Pallas DenseSAGEConv.forward.

    x: (N, F_in) f32, adj: (N, N) f32, weight: (F_in, F_out) f32.
    Returns (N, F_out) f32 (or (N, F_in) when has_weight=False).
    matmul_dtype: optionally jnp.bfloat16 to halve the adj/h HBM streams
    (adjacency 0/1 is exact in bf16; xW loses ~1e-2 rel precision).
    """
    N = x.shape[0]

    # --- Hoisted feature transform (done once, outside the tiled hot loop). ---
    h = jnp.dot(x, weight, preferred_element_type=jnp.float32) if has_weight else x
    h = h.astype(jnp.float32)
    F = h.shape[1]

    # --- Lane-dense / (8,128)-aligned padding. -------------------------------
    tile_nk = max(128, min(tile, _round_up(N, 128)))  # TILE_M == TILE_K, mult. of 128
    n_pad = _round_up(N, tile_nk)
    f_pad = _round_up(F, 128)

    adj_p = jnp.pad(adj.astype(jnp.float32), ((0, n_pad - N), (0, n_pad - N)))
    h_p = jnp.pad(h, ((0, n_pad - N), (0, f_pad - F)))
    if matmul_dtype is not None:
        adj_p = adj_p.astype(matmul_dtype)
        h_p = h_p.astype(matmul_dtype)
    elem_bytes = jnp.dtype(adj_p.dtype).itemsize

    grid = (n_pad // tile_nk, n_pad // tile_nk)

    kernel = functools.partial(_dense_sage_kernel, self_loop=self_loop)

    out_p = pl.pallas_call(
        kernel,
        out_shape=jax.ShapeDtypeStruct((n_pad, f_pad), jnp.float32),
        grid_spec=pltpu.PrefetchScalarGridSpec(
            num_scalar_prefetch=0,
            grid=grid,
            in_specs=[
                # adj tile: rows follow the output row tile, cols follow K.
                pl.BlockSpec((tile_nk, tile_nk), lambda i, k: (i, k)),
                # h tile: rows follow K (adjacency columns), full feature width.
                pl.BlockSpec((tile_nk, f_pad), lambda i, k: (k, 0)),
            ],
            # Output block is constant across K -> resident accumulator target.
            out_specs=pl.BlockSpec((tile_nk, f_pad), lambda i, k: (i, 0)),
            scratch_shapes=[
                pltpu.VMEM((tile_nk, f_pad), jnp.float32),  # agg accumulator
                pltpu.VMEM((tile_nk, 1), jnp.float32),      # degree accumulator
            ],
        ),
        compiler_params=pltpu.CompilerParams(
            dimension_semantics=("parallel", "arbitrary"),
            vmem_limit_bytes=32 * 1024 * 1024,
        ),
        cost_estimate=pl.CostEstimate(
            flops=2 * n_pad * n_pad * f_pad,
            transcendentals=n_pad,
            bytes_accessed=(elem_bytes * (n_pad * n_pad + n_pad * f_pad)
                            + 4 * n_pad * f_pad),
        ),
    )(adj_p, h_p)

    return out_p[:N, :F]


def _reference(x, adj, weight, *, has_weight=True, self_loop=True):
    """Pure-JAX reference mirroring the PyTorch forward."""
    N = x.shape[0]
    if self_loop:
        adj = adj.at[jnp.arange(N), jnp.arange(N)].set(0.0)
    if has_weight:
        x = x @ weight
    out = adj @ x
    deg = jnp.maximum(jnp.sum(adj, axis=-1, keepdims=True), 1.0)
    return out / deg


if __name__ == "__main__":
    # Small but non-trivial shapes: N not a multiple of 128 (exercises padding),
    # tile=128 so the grid is (2, 2) and both the K accumulation and the
    # diagonal-tile gating are exercised.
    N, IN_C, OUT_C = 200, 48, 40
    HAS_WEIGHT, SELF_LOOP = True, True

    key = jax.random.PRNGKey(0)
    kx, ka, kw = jax.random.split(key, 3)

    x = jax.random.normal(kx, (N, IN_C), dtype=jnp.float32)
    adj = (jax.random.uniform(ka, (N, N), dtype=jnp.float32) > 0.5).astype(jnp.float32)
    weight = jax.random.normal(kw, (IN_C, OUT_C), dtype=jnp.float32) * (
        1.0 / jnp.sqrt(jnp.float32(IN_C)))

    out = dense_sage_conv(x, adj, weight,
                          has_weight=HAS_WEIGHT, self_loop=SELF_LOOP, tile=128)
    out = jax.block_until_ready(out)

    ref = _reference(x, adj, weight, has_weight=HAS_WEIGHT, self_loop=SELF_LOOP)
    assert out.shape == (N, OUT_C), out.shape
    # Tolerance accounts for approx-reciprocal normalization (EUP vrcp).
    assert jnp.allclose(out, ref, atol=2e-3, rtol=2e-3), (
        float(jnp.max(jnp.abs(out - ref))))

    print("KERNEL_OK")
</pallas_src>

<mosaic_0001>
module attributes {stable_mosaic.version = 11 : i64} {
  func.func @_dense_sage_kernel(%arg0: i32, %arg1: i32, %arg2: memref<128x128xf32, #tpu.memory_space<vmem>>, %arg3: memref<128x128xf32, #tpu.memory_space<vmem>>, %arg4: memref<128x128xf32, #tpu.memory_space<vmem>>, %arg5: memref<128x128xf32, #tpu.memory_space<vmem>>, %arg6: memref<128x1xf32, #tpu.memory_space<vmem>>) attributes {dimension_semantics = [#tpu.dimension_semantics<parallel>, #tpu.dimension_semantics<arbitrary>], iteration_bounds = array<i64: 2, 2>, scalar_prefetch = 0 : i64, scratch_operands = 2 : i64, tpu.core_type = #tpu.core_type<tc>, window_params = [{transform_indices = @transform_0, window_bounds = array<i64: 128, 128>}, {transform_indices = @transform_1, window_bounds = array<i64: 128, 128>}, {transform_indices = @transform_2, window_bounds = array<i64: 128, 128>}]} {
    %c0_i32 = arith.constant 0 : i32
    %0 = arith.cmpi eq, %arg1, %c0_i32 : i32
    %1 = arith.extui %0 : i1 to i32
    %c0_i32_0 = arith.constant 0 : i32
    %2 = arith.cmpi ne, %1, %c0_i32_0 : i32
    scf.if %2 {
      %cst_15 = arith.constant 0.000000e+00 : f32
      %25 = vector.broadcast %cst_15 : f32 to vector<128x128xf32>
      %c0_16 = arith.constant 0 : index
      %c0_17 = arith.constant 0 : index
      %26 = vector.load %arg5[%c0_16, %c0_17] : memref<128x128xf32, #tpu.memory_space<vmem>>, vector<128x128xf32>
      tpu.vector_store %arg5[%c0_16, %c0_17], %25 {strides = array<i32>} : memref<128x128xf32, #tpu.memory_space<vmem>>, vector<128x128xf32>,
      %cst_18 = arith.constant 0.000000e+00 : f32
      %27 = vector.broadcast %cst_18 : f32 to vector<128x1xf32>
      %c0_19 = arith.constant 0 : index
      %c0_20 = arith.constant 0 : index
      %28 = vector.load %arg6[%c0_19, %c0_20] : memref<128x1xf32, #tpu.memory_space<vmem>>, vector<128x1xf32>
      tpu.vector_store %arg6[%c0_19, %c0_20], %27 {strides = array<i32>} : memref<128x1xf32, #tpu.memory_space<vmem>>, vector<128x1xf32>,
    } else {
    }
    %c0 = arith.constant 0 : index
    %c0_1 = arith.constant 0 : index
    %3 = vector.load %arg2[%c0, %c0_1] : memref<128x128xf32, #tpu.memory_space<vmem>>, vector<128x128xf32>
    %4 = tpu.iota {dimensions = array<i32: 0>} : vector<128x128xi32>
    %5 = tpu.iota {dimensions = array<i32: 1>} : vector<128x128xi32>
    %6 = arith.cmpi eq, %4, %5 : vector<128x128xi32>
    %7 = arith.cmpi eq, %arg0, %arg1 : i32
    %8 = vector.broadcast %7 : i1 to vector<128x128xi1>
    %9 = arith.andi %6, %8 : vector<128x128xi1>
    %cst = arith.constant 0.000000e+00 : f32
    %10 = vector.broadcast %cst : f32 to vector<128x128xf32>
    %11 = arith.select %9, %10, %3 : vector<128x128xi1>, vector<128x128xf32>
    %c0_2 = arith.constant 0 : index
    %c0_3 = arith.constant 0 : index
    %12 = vector.load %arg6[%c0_2, %c0_3] : memref<128x1xf32, #tpu.memory_space<vmem>>, vector<128x1xf32>
    %cst_4 = arith.constant dense<0.000000e+00> : vector<128xf32>
    %13 = vector.multi_reduction <add>, %11, %cst_4 [1] : vector<128x128xf32> to vector<128xf32>
    %14 = vector.shape_cast %13 : vector<128xf32> to vector<128x1xf32>
    %15 = arith.addf %12, %14 : vector<128x1xf32>
    %c0_5 = arith.constant 0 : index
    %c0_6 = arith.constant 0 : index
    %16 = vector.load %arg6[%c0_5, %c0_6] : memref<128x1xf32, #tpu.memory_space<vmem>>, vector<128x1xf32>
    tpu.vector_store %arg6[%c0_5, %c0_6], %15 {strides = array<i32>} : memref<128x1xf32, #tpu.memory_space<vmem>>, vector<128x1xf32>,
    %c0_7 = arith.constant 0 : index
    %c0_8 = arith.constant 0 : index
    %17 = vector.load %arg5[%c0_7, %c0_8] : memref<128x128xf32, #tpu.memory_space<vmem>>, vector<128x128xf32>
    %c0_9 = arith.constant 0 : index
    %c0_10 = arith.constant 0 : index
    %18 = vector.load %arg3[%c0_9, %c0_10] : memref<128x128xf32, #tpu.memory_space<vmem>>, vector<128x128xf32>
    %cst_11 = arith.constant dense<0.000000e+00> : vector<128x128xf32>
    %19 = tpu.matmul %11, %18, %cst_11 {dimension_numbers = #tpu.dot_dimension_numbers<[1], [0], [0], [1], [0, 0, 1, 1], [], []>} : vector<128x128xf32>, vector<128x128xf32>, vector<128x128xf32> -> vector<128x128xf32>
    %20 = arith.addf %17, %19 : vector<128x128xf32>
    %c0_12 = arith.constant 0 : index
    %c0_13 = arith.constant 0 : index
    %21 = vector.load %arg5[%c0_12, %c0_13] : memref<128x128xf32, #tpu.memory_space<vmem>>, vector<128x128xf32>
    tpu.vector_store %arg5[%c0_12, %c0_13], %20 {strides = array<i32>} : memref<128x128xf32, #tpu.memory_space<vmem>>, vector<128x128xf32>,
    %c1_i32 = arith.constant 1 : i32
    %22 = arith.cmpi eq, %arg1, %c1_i32 : i32
    %23 = arith.extui %22 : i1 to i32
    %c0_i32_14 = arith.constant 0 : i32
    %24 = arith.cmpi ne, %23, %c0_i32_14 : i32
    scf.if %24 {
      %c0_15 = arith.constant 0 : index
      %c0_16 = arith.constant 0 : index
      %25 = vector.load %arg6[%c0_15, %c0_16] : memref<128x1xf32, #tpu.memory_space<vmem>>, vector<128x1xf32>
      %cst_17 = arith.constant 1.000000e+00 : f32
      %26 = vector.broadcast %cst_17 : f32 to vector<128x1xf32>
      %27 = arith.maximumf %25, %26 : vector<128x1xf32>
      %28 = tpu.reciprocal %27 {approx = true} : vector<128x1xf32> -> vector<128x1xf32>
      %c0_18 = arith.constant 0 : index
      %c0_19 = arith.constant 0 : index
      %29 = vector.load %arg5[%c0_18, %c0_19] : memref<128x128xf32, #tpu.memory_space<vmem>>, vector<128x128xf32>
      %30 = vector.broadcast %28 : vector<128x1xf32> to vector<128x128xf32>
      %31 = arith.mulf %29, %30 : vector<128x128xf32>
      %c0_20 = arith.constant 0 : index
      %c0_21 = arith.constant 0 : index
      %32 = vector.load %arg4[%c0_20, %c0_21] : memref<128x128xf32, #tpu.memory_space<vmem>>, vector<128x128xf32>
      tpu.vector_store %arg4[%c0_20, %c0_21], %31 {strides = array<i32>} : memref<128x128xf32, #tpu.memory_space<vmem>>, vector<128x128xf32>,
    } else {
    }
    return
  }
  func.func @transform_0(%arg0: i32, %arg1: i32) -> (i32, i32) {
    %c0_i32 = arith.constant 0 : i32
    return %arg0, %arg1 : i32, i32
  }
  func.func @transform_1(%arg0: i32, %arg1: i32) -> (i32, i32) {
    %c0_i32 = arith.constant 0 : i32
    %c0_i32_0 = arith.constant 0 : i32
    return %arg1, %c0_i32 : i32, i32
  }
  func.func @transform_2(%arg0: i32, %arg1: i32) -> (i32, i32) {
    %c0_i32 = arith.constant 0 : i32
    %c0_i32_0 = arith.constant 0 : i32
    return %arg0, %c0_i32 : i32, i32
  }
}

</mosaic_0001>

<llo_original>
// kernel: tpu_custom_call.1
$region0: #{tpu_custom_call.1}
  #allocation0 [shape = 'u32[]', space=smem, size = 0x4, offset = 0x4, fixed_abs, tag = 'smem constant byte address 0x4 - core index']
  #allocation1 [shape = 'u32[144,128]{1,0:T(1,128)}', space=vmem, size = 0x12000, scoped, tag = 'internal scratch']
  #allocation2 [shape = 'f32[128,128]{1,0:T(8,128)}', space=vmem, size = 0x10000, scoped, tag = 'scratch operand']
  #allocation3 [shape = 'f32[128,1]{1,0:T(8,128)}', space=vmem, size = 0x10000, scoped, tag = 'scratch operand']
  %s0 = inlined_call_operand.hbm [shape: f32[256,256], index: 0, kind: input, shape index: {}]
  %s1 = inlined_call_operand.hbm [shape: f32[256,128], index: 1, kind: input, shape index: {}]
  %s2 = inlined_call_operand.hbm [shape: f32[256,128], index: 2, kind: output, shape index: {}]
  %s3 = sld [smem:[#allocation0]]
  $region57: #{tpu_custom_call.1} parent=0
    _
  %s5 = ssub.s32 1, %s3
  %s6 = scalar_select 0, %s5, %s3
  $region1: #{tpu_custom_call.1} parent=0
    #allocation4 [shape = 'u8[131072]{0}', space=vmem, size = 0x20000, scoped, tag = 'input window, operand 0']
    #allocation5 [shape = 's32[2]{0}', space=sflag, size = 0x8, scoped, tag = 'scoped memory for tpu_custom_call.1']
    #allocation6 [shape = 's32[2]{0}', space=sflag, size = 0x8, scoped, tag = 'scoped memory for tpu_custom_call.1']
    #allocation7 [shape = 'u8[131072]{0}', space=vmem, size = 0x20000, scoped, tag = 'input window, operand 1']
    #allocation8 [shape = 's32[2]{0}', space=sflag, size = 0x8, scoped, tag = 'scoped memory for tpu_custom_call.1']
    #allocation9 [shape = 'u8[131072]{0}', space=vmem, size = 0x20000, scoped, tag = 'output window, operand 0']
    %7 = vsyncpa [#allocation5], 0
    %s8 = scalar_lea.sflag [#allocation5], 1
    %9 = vsyncpa %s8, 0
    %10 = vsyncpa [#allocation8], 0
    %s11 = scalar_lea.sflag [#allocation8], 1
    %12 = vsyncpa %s11, 0
    %13 = vsyncpa [#allocation6], 0
    %s14 = scalar_lea.sflag [#allocation6], 1
    %15 = vsyncpa %s14, 0
    loop: start=0, step=1, limit=6
    $region2: #{tpu_custom_call.1} parent=1 // loop_pre_header
      _
    $region3: #{tpu_custom_call.1} parent=1 // loop_header
      %s17 = sphi 0, %s21
      %p18 = scmp.ge.s32.totalorder %s17, 6
      %s24 = sphi 0, %s36
      %s25 = sphi 0, %s32
      %s26 = sphi 0, %s24
      %s27 = sphi 0, %s25
      %s28 = sphi 0, %s26
      %s29 = sphi 0, %s27
      %s41 = sphi 0, %s43
      %s44 = sphi 0, %s41
      %s45 = sphi 0, %s44
      %s61 = sphi 0, %s45
      %s67 = sphi 0, %s69
      %s70 = sphi 0, %s67
      %s71 = sphi 0, %s70
      %s87 = sphi 0, %s71
      %s93 = sphi 0, %s95
      %s96 = sphi 0, %s93
      %s97 = sphi 0, %s96
      %s113 = sphi 0, %s97
    $region4: #{tpu_custom_call.1} parent=1 // loop_header_branch
      %20 = sbr.rel (%p18) target = $region8
    $region5: #{tpu_custom_call.1} parent=1 // loop_body
      %s22 = ssub.s32 %s17, 1
      %s23 = ssub.s32 %s17, 2
      %s30 = sadd.s32 1, %s25
      %p31 = scmp.ge.s32.totalorder %s30, 2
      %s32 = scalar_select %p31, 0, %s30
      %s33 = sadd.s32 1, %s24
      %s34 = scalar_select %p31, %s33, %s24
      %p35 = scmp.ge.s32.totalorder %s34, 2
      %s36 = scalar_select %p35, 0, %s34
      %s37 = ssub.s32 %s24, %s36
      %s38 = ssub.s32 %s25, %s32
      %s39 = sor.u32 %s37, %s38
      %p40 = scmp.eq.s32.totalorder %s39, 0
      %s42 = sadd.s32 %s41, 1
      %s43 = scalar_select %p40, %s41, %s42
      %p46 = pneg %p40
      %p47 = scmp.eq.s32.totalorder %s17, 3
      %p48 = por %p46, %p47
      %p49 = scmp.ne.s32.totalorder %s41, %s44
      %p50 = scmp.eq.s32.totalorder %s17, 0
      %p51 = por %p49, %p50
      %p52 = scmp.ne.s32.totalorder %s41, %s44
      %p53 = scmp.eq.s32.totalorder %s22, 3
      %p54 = por %p52, %p53
      %p55 = scmp.ne.s32.totalorder %s44, %s45
      %p56 = scmp.eq.s32.totalorder %s22, 0
      %p57 = por %p55, %p56
      %p58 = scmp.ne.s32.totalorder %s44, %s45
      %p59 = scmp.eq.s32.totalorder %s23, 3
      %p60 = por %p58, %p59
      %p62 = scmp.ne.s32.totalorder %s45, %s61
      %p63 = scmp.eq.s32.totalorder %s23, 0
      %p64 = por %p62, %p63
      %s65 = ssub.s32 %s25, %s32
      %p66 = scmp.eq.s32.totalorder %s65, 0
      %s68 = sadd.s32 %s67, 1
      %s69 = scalar_select %p66, %s67, %s68
      %p72 = pneg %p66
      %p73 = scmp.eq.s32.totalorder %s17, 3
      %p74 = por %p72, %p73
      %p75 = scmp.ne.s32.totalorder %s67, %s70
      %p76 = scmp.eq.s32.totalorder %s17, 0
      %p77 = por %p75, %p76
      %p78 = scmp.ne.s32.totalorder %s67, %s70
      %p79 = scmp.eq.s32.totalorder %s22, 3
      %p80 = por %p78, %p79
      %p81 = scmp.ne.s32.totalorder %s70, %s71
      %p82 = scmp.eq.s32.totalorder %s22, 0
      %p83 = por %p81, %p82
      %p84 = scmp.ne.s32.totalorder %s70, %s71
      %p85 = scmp.eq.s32.totalorder %s23, 3
      %p86 = por %p84, %p85
      %p88 = scmp.ne.s32.totalorder %s71, %s87
      %p89 = scmp.eq.s32.totalorder %s23, 0
      %p90 = por %p88, %p89
      %s91 = ssub.s32 %s24, %s36
      %p92 = scmp.eq.s32.totalorder %s91, 0
      %s94 = sadd.s32 %s93, 1
      %s95 = scalar_select %p92, %s93, %s94
      %p98 = pneg %p92
      %p99 = scmp.eq.s32.totalorder %s17, 3
      %p100 = por %p98, %p99
      %p101 = scmp.ne.s32.totalorder %s93, %s96
      %p102 = scmp.eq.s32.totalorder %s17, 0
      %p103 = por %p101, %p102
      %p104 = scmp.ne.s32.totalorder %s93, %s96
      %p105 = scmp.eq.s32.totalorder %s22, 3
      %p106 = por %p104, %p105
      %p107 = scmp.ne.s32.totalorder %s96, %s97
      %p108 = scmp.eq.s32.totalorder %s22, 0
      %p109 = por %p107, %p108
      %p110 = scmp.ne.s32.totalorder %s96, %s97
      %p111 = scmp.eq.s32.totalorder %s23, 3
      %p112 = por %p110, %p111
      %p114 = scmp.ne.s32.totalorder %s97, %s113
      %p115 = scmp.eq.s32.totalorder %s23, 0
      %p116 = por %p114, %p115
      %p117 = scmp.le.s32.totalorder 1, %s17
      %p118 = scmp.lt.s32.totalorder %s17, 5
      %p119 = pnand %p117, %p118
      %p120 = pneg %p119
      // Predicated region
      $region9: #{tpu_custom_call.1} parent=5 // pred_check
        _
      $region10: #{tpu_custom_call.1} parent=5 // pred_check_branch
        %122 = sbr.rel (%p119) target = $region12
      $region11: #{tpu_custom_call.1} parent=5 // pred_region
        %s123 = ssub.s32 %s17, 1
      $region12: #{tpu_custom_call.1} parent=5 // pred_fallthru
        _
      %p124 = scmp.lt.s32.totalorder %s17, 4
      // Predicated region
      $region13: #{tpu_custom_call.1} parent=5 // pred_check
        %p125 = pneg %p124
      $region14: #{tpu_custom_call.1} parent=5 // pred_check_branch
        %127 = sbr.rel (%p125) target = $region16
      $region15: #{tpu_custom_call.1} parent=5 // pred_region
        // Predicated region
        $region17: #{tpu_custom_call.1} parent=15 // pred_check
          %p128 = pneg %p51
        $region18: #{tpu_custom_call.1} parent=15 // pred_check_branch
          %130 = sbr.rel (%p128) target = $region20
        $region19: #{tpu_custom_call.1} parent=15 // pred_region
          %s131 = sand.u32 %s41, 1
          %s132 = scalar_lea.sflag [#allocation5], %s131
          %s133 = sand.u32 %s41, 1
          %s134 = smul.addr %s133, 128
          %s135 = scalar_lea.vmem [#allocation4], %s134
          %s136 = smul.u32 16, %s24
          %s138 = ssub.s32 2048, 2048
          %139 = vsyncadd %s132, %s138
          %s140 = smul.addr %s136, 2
          %s141 = sadd.s32 %s25, %s140
          %s142 = smul.addr %s141, 128
          %s143 = scalar_lea.hbm %s0, %s142
          %s144 = sshll.u32 %s135, 4
          %s145 = int_to_ptr.vmem [resolvable:$true] %s144
          %150 = dma.hbm_to_vmem [thread:$0]  %s143, 2048, %s145, %s132, 256, 128, 8
        $region20: #{tpu_custom_call.1} parent=15 // pred_fallthru
          _
        // Predicated region
        $region21: #{tpu_custom_call.1} parent=15 // pred_check
          %p151 = pneg %p77
        $region22: #{tpu_custom_call.1} parent=15 // pred_check_branch
          %153 = sbr.rel (%p151) target = $region24
        $region23: #{tpu_custom_call.1} parent=15 // pred_region
          %s154 = sand.u32 %s67, 1
          %s155 = scalar_lea.sflag [#allocation8], %s154
          %s156 = sand.u32 %s67, 1
          %s157 = smul.addr %s156, 128
          %s158 = scalar_lea.vmem [#allocation7], %s157
          %s159 = smul.u32 16, %s25
          %s161 = ssub.s32 2048, 2048
          %162 = vsyncadd %s155, %s161
          %s163 = smul.addr %s159, 128
          %s164 = scalar_lea.hbm %s1, %s163
          %s165 = sshll.u32 %s158, 4
          %s166 = int_to_ptr.vmem [resolvable:$true] %s165
          %171 = dma.hbm_to_vmem [thread:$0]  %s164, 2048, %s166, %s155, 128, 128, 8
        $region24: #{tpu_custom_call.1} parent=15 // pred_fallthru
          _
      $region16: #{tpu_custom_call.1} parent=5 // pred_fallthru
        _
      %p172 = scmp.le.s32.totalorder 1, %s17
      %p173 = scmp.lt.s32.totalorder %s17, 5
      %p174 = pnand %p172, %p173
      %p175 = pneg %p174
      // Predicated region
      $region25: #{tpu_custom_call.1} parent=5 // pred_check
        _
      $region26: #{tpu_custom_call.1} parent=5 // pred_check_branch
        %177 = sbr.rel (%p174) target = $region28
      $region27: #{tpu_custom_call.1} parent=5 // pred_region
        %s178 = ssub.s32 %s17, 1
        %s179 = sand.u32 %s44, 1
        %s180 = scalar_lea.sflag [#allocation5], %s179
        %s181 = sand.u32 %s44, 1
        %s182 = smul.addr %s181, 128
        %s183 = scalar_lea.vmem [#allocation4], %s182
        // Predicated region
        $region29: #{tpu_custom_call.1} parent=27 // pred_check
          %p184 = pneg %p57
        $region30: #{tpu_custom_call.1} parent=27 // pred_check_branch
          %186 = sbr.rel (%p184) target = $region32
        $region31: #{tpu_custom_call.1} parent=27 // pred_region
          %187 = dma.done %s180, 2048
        $region32: #{tpu_custom_call.1} parent=27 // pred_fallthru
          _
        %s188 = sand.u32 %s70, 1
        %s189 = scalar_lea.sflag [#allocation8], %s188
        %s190 = sand.u32 %s70, 1
        %s191 = smul.addr %s190, 128
        %s192 = scalar_lea.vmem [#allocation7], %s191
        // Predicated region
        $region33: #{tpu_custom_call.1} parent=27 // pred_check
          %p193 = pneg %p83
        $region34: #{tpu_custom_call.1} parent=27 // pred_check_branch
          %195 = sbr.rel (%p193) target = $region36
        $region35: #{tpu_custom_call.1} parent=27 // pred_region
          %196 = dma.done %s189, 2048
        $region36: #{tpu_custom_call.1} parent=27 // pred_fallthru
          _
        %s197 = sand.u32 %s44, 1
        %s198 = scalar_lea.sflag [#allocation5], %s197
        %s199 = sand.u32 %s44, 1
        %s200 = smul.addr %s199, 128
        %s201 = scalar_lea.vmem [#allocation4], %s200
        %p202 = pneg %p57
        %p203 = pneg %p54
        %s204 = sand.u32 %s70, 1
        %s205 = scalar_lea.sflag [#allocation8], %s204
        %s206 = sand.u32 %s70, 1
        %s207 = smul.addr %s206, 128
        %s208 = scalar_lea.vmem [#allocation7], %s207
        %p209 = pneg %p83
        %p210 = pneg %p80
        %p211 = pneg %p109
        %p212 = pneg %p106
        %s213 = sand.u32 %s96, 1
        %s214 = scalar_lea.sflag [#allocation6], %s213
        %s215 = sand.u32 %s96, 1
        %s216 = smul.addr %s215, 128
        %s217 = scalar_lea.vmem [#allocation9], %s216
        %s218 = smul.u32 16, %s26
        %s219 = smul.u32 16, %s27
        %s220 = smul.u32 16, %s26
        %p221 = scmp.eq.s32.totalorder %s27, 0
        // Predicated region
        $region37: #{tpu_custom_call.1} parent=27 // pred_check
          %p222 = pneg %p221
        $region38: #{tpu_custom_call.1} parent=27 // pred_check_branch
          %224 = sbr.rel (%p222) target = $region40
        $region39: #{tpu_custom_call.1} parent=27 // pred_region
          %225 = vst [vmem:[#allocation2] sm:$0xff] 0.0
          %226 = vst [vmem:[#allocation2 + $0x8] sm:$0xff] 0.0
          %227 = vst [vmem:[#allocation2 + $0x10] sm:$0xff] 0.0
          %228 = vst [vmem:[#allocation2 + $0x18] sm:$0xff] 0.0
          %229 = vst [vmem:[#allocation2 + $0x20] sm:$0xff] 0.0
          %230 = vst [vmem:[#allocation2 + $0x28] sm:$0xff] 0.0
          %231 = vst [vmem:[#allocation2 + $0x30] sm:$0xff] 0.0
          %232 = vst [vmem:[#allocation2 + $0x38] sm:$0xff] 0.0
          %233 = vst [vmem:[#allocation2 + $0x40] sm:$0xff] 0.0
          %234 = vst [vmem:[#allocation2 + $0x48] sm:$0xff] 0.0
          %235 = vst [vmem:[#allocation2 + $0x50] sm:$0xff] 0.0
          %236 = vst [vmem:[#allocation2 + $0x58] sm:$0xff] 0.0
          %237 = vst [vmem:[#allocation2 + $0x60] sm:$0xff] 0.0
          %238 = vst [vmem:[#allocation2 + $0x68] sm:$0xff] 0.0
          %239 = vst [vmem:[#allocation2 + $0x70] sm:$0xff] 0.0
          %240 = vst [vmem:[#allocation2 + $0x78] sm:$0xff] 0.0
          %vm241 = vcmask 7168
          %242 = vst.msk [vmem:[#allocation3] sm:$0xff] %vm241, 0.0
          %243 = vst.msk [vmem:[#allocation3 + $0x8] sm:$0xff] %vm241, 0.0
          %244 = vst.msk [vmem:[#allocation3 + $0x10] sm:$0xff] %vm241, 0.0
          %245 = vst.msk [vmem:[#allocation3 + $0x18] sm:$0xff] %vm241, 0.0
          %246 = vst.msk [vmem:[#allocation3 + $0x20] sm:$0xff] %vm241, 0.0
          %247 = vst.msk [vmem:[#allocation3 + $0x28] sm:$0xff] %vm241, 0.0
          %248 = vst.msk [vmem:[#allocation3 + $0x30] sm:$0xff] %vm241, 0.0
          %249 = vst.msk [vmem:[#allocation3 + $0x38] sm:$0xff] %vm241, 0.0
          %250 = vst.msk [vmem:[#allocation3 + $0x40] sm:$0xff] %vm241, 0.0
          %251 = vst.msk [vmem:[#allocation3 + $0x48] sm:$0xff] %vm241, 0.0
          %252 = vst.msk [vmem:[#allocation3 + $0x50] sm:$0xff] %vm241, 0.0
          %253 = vst.msk [vmem:[#allocation3 + $0x58] sm:$0xff] %vm241, 0.0
          %254 = vst.msk [vmem:[#allocation3 + $0x60] sm:$0xff] %vm241, 0.0
          %255 = vst.msk [vmem:[#allocation3 + $0x68] sm:$0xff] %vm241, 0.0
          %256 = vst.msk [vmem:[#allocation3 + $0x70] sm:$0xff] %vm241, 0.0
          %257 = vst.msk [vmem:[#allocation3 + $0x78] sm:$0xff] %vm241, 0.0
        $region40: #{tpu_custom_call.1} parent=27 // pred_fallthru
          _
        %v258 = vld [vmem:[%s183] sm:$0xff]
        %v259 = vld [vmem:[%s183 + $0x8] sm:$0xff]
        %v260 = vld [vmem:[%s183 + $0x10] sm:$0xff]
        %v261 = vld [vmem:[%s183 + $0x18] sm:$0xff]
        %v262 = vld [vmem:[%s183 + $0x20] sm:$0xff]
        %v263 = vld [vmem:[%s183 + $0x28] sm:$0xff]
        %v264 = vld [vmem:[%s183 + $0x30] sm:$0xff]
        %v265 = vld [vmem:[%s183 + $0x38] sm:$0xff]
        %v266 = vld [vmem:[%s183 + $0x40] sm:$0xff]
        %v267 = vld [vmem:[%s183 + $0x48] sm:$0xff]
        %v268 = vld [vmem:[%s183 + $0x50] sm:$0xff]
        %v269 = vld [vmem:[%s183 + $0x58] sm:$0xff]
        %v270 = vld [vmem:[%s183 + $0x60] sm:$0xff]
        %v271 = vld [vmem:[%s183 + $0x68] sm:$0xff]
        %v272 = vld [vmem:[%s183 + $0x70] sm:$0xff]
        %v273 = vld [vmem:[%s183 + $0x78] sm:$0xff]
        %v274 = vlaneseq
        %v275 = vshrl.u32 %v274, 7
        %v276 = vadd.s32 %v275, 8
        %v277 = vadd.s32 %v275, 16
        %v278 = vadd.s32 %v275, 24
        %v279 = vadd.s32 %v275, 32
        %v280 = vadd.s32 %v275, 40
        %v281 = vadd.s32 %v275, 48
        %v282 = vadd.s32 %v275, 56
        %v283 = vadd.s32 %v275, 64
        %v284 = vadd.s32 %v275, 72
        %v285 = vadd.s32 %v275, 80
        %v286 = vadd.s32 %v275, 88
        %v287 = vadd.s32 %v275, 96
        %v288 = vadd.s32 %v275, 104
        %v289 = vadd.s32 %v275, 112
        %v290 = vadd.s32 %v275, 120
        %v291 = vlaneseq
        %v292 = vand.u32 %v291, 127
        %vm293 = vcmp.eq.s32.totalorder %v275, %v292
        %vm294 = vcmp.eq.s32.totalorder %v276, %v292
        %vm295 = vcmp.eq.s32.totalorder %v277, %v292
        %vm296 = vcmp.eq.s32.totalorder %v278, %v292
        %vm297 = vcmp.eq.s32.totalorder %v279, %v292
        %vm298 = vcmp.eq.s32.totalorder %v280, %v292
        %vm299 = vcmp.eq.s32.totalorder %v281, %v292
        %vm300 = vcmp.eq.s32.totalorder %v282, %v292
        %vm301 = vcmp.eq.s32.totalorder %v283, %v292
        %vm302 = vcmp.eq.s32.totalorder %v284, %v292
        %vm303 = vcmp.eq.s32.totalorder %v285, %v292
        %vm304 = vcmp.eq.s32.totalorder %v286, %v292
        %vm305 = vcmp.eq.s32.totalorder %v287, %v292
        %vm306 = vcmp.eq.s32.totalorder %v288, %v292
        %vm307 = vcmp.eq.s32.totalorder %v289, %v292
        %vm308 = vcmp.eq.s32.totalorder %v290, %v292
        %p309 = scmp.eq.s32.totalorder %s26, %s27
        %s310 = scalar_select %p309, 1, 0
        %v311 = vstv %s310
        %vm312 = vcmp.eq.s32.totalorder %v311, 1
        %vm313 = vmand %vm293, %vm312
        %vm314 = vmand %vm294, %vm312
        %vm315 = vmand %vm295, %vm312
        %vm316 = vmand %vm296, %vm312
        %vm317 = vmand %vm297, %vm312
        %vm318 = vmand %vm298, %vm312
        %vm319 = vmand %vm299, %vm312
        %vm320 = vmand %vm300, %vm312
        %vm321 = vmand %vm301, %vm312
        %vm322 = vmand %vm302, %vm312
        %vm323 = vmand %vm303, %vm312
        %vm324 = vmand %vm304, %vm312
        %vm325 = vmand %vm305, %vm312
        %vm326 = vmand %vm306, %vm312
        %vm327 = vmand %vm307, %vm312
        %vm328 = vmand %vm308, %vm312
        %v329 = vsel %vm313, 0.0, %v258
        %v330 = vsel %vm314, 0.0, %v259
        %v331 = vsel %vm315, 0.0, %v260
        %v332 = vsel %vm316, 0.0, %v261
        %v333 = vsel %vm317, 0.0, %v262
        %v334 = vsel %vm318, 0.0, %v263
        %v335 = vsel %vm319, 0.0, %v264
        %v336 = vsel %vm320, 0.0, %v265
        %v337 = vsel %vm321, 0.0, %v266
        %v338 = vsel %vm322, 0.0, %v267
        %v339 = vsel %vm323, 0.0, %v268
        %v340 = vsel %vm324, 0.0, %v269
        %v341 = vsel %vm325, 0.0, %v270
        %v342 = vsel %vm326, 0.0, %v271
        %v343 = vsel %vm327, 0.0, %v272
        %v344 = vsel %vm328, 0.0, %v273
        %v345 = vld [vmem:[#allocation3] sm:$0xff]
        %v346 = vld [vmem:[#allocation3 + $0x8] sm:$0xff]
        %v347 = vld [vmem:[#allocation3 + $0x10] sm:$0xff]
        %v348 = vld [vmem:[#allocation3 + $0x18] sm:$0xff]
        %v349 = vld [vmem:[#allocation3 + $0x20] sm:$0xff]
        %v350 = vld [vmem:[#allocation3 + $0x28] sm:$0xff]
        %v351 = vld [vmem:[#allocation3 + $0x30] sm:$0xff]
        %v352 = vld [vmem:[#allocation3 + $0x38] sm:$0xff]
        %v353 = vld [vmem:[#allocation3 + $0x40] sm:$0xff]
        %v354 = vld [vmem:[#allocation3 + $0x48] sm:$0xff]
        %v355 = vld [vmem:[#allocation3 + $0x50] sm:$0xff]
        %v356 = vld [vmem:[#allocation3 + $0x58] sm:$0xff]
        %v357 = vld [vmem:[#allocation3 + $0x60] sm:$0xff]
        %v358 = vld [vmem:[#allocation3 + $0x68] sm:$0xff]
        %v359 = vld [vmem:[#allocation3 + $0x70] sm:$0xff]
        %v360 = vld [vmem:[#allocation3 + $0x78] sm:$0xff]
        %361 = vadd.xlane.f32.xlu0 %v329
        %v362 = vpop.xlane.xlu0 %361
        %363 = vadd.xlane.f32.xlu0 %v330
        %v364 = vpop.xlane.xlu0 %363
        %365 = vadd.xlane.f32.xlu0 %v331
        %v366 = vpop.xlane.xlu0 %365
        %367 = vadd.xlane.f32.xlu0 %v332
        %v368 = vpop.xlane.xlu0 %367
        %369 = vadd.xlane.f32.xlu0 %v333
        %v370 = vpop.xlane.xlu0 %369
        %371 = vadd.xlane.f32.xlu0 %v334
        %v372 = vpop.xlane.xlu0 %371
        %373 = vadd.xlane.f32.xlu0 %v335
        %v374 = vpop.xlane.xlu0 %373
        %375 = vadd.xlane.f32.xlu0 %v336
        %v376 = vpop.xlane.xlu0 %375
        %377 = vadd.xlane.f32.xlu0 %v337
        %v378 = vpop.xlane.xlu0 %377
        %379 = vadd.xlane.f32.xlu0 %v338
        %v380 = vpop.xlane.xlu0 %379
        %381 = vadd.xlane.f32.xlu0 %v339
        %v382 = vpop.xlane.xlu0 %381
        %383 = vadd.xlane.f32.xlu0 %v340
        %v384 = vpop.xlane.xlu0 %383
        %385 = vadd.xlane.f32.xlu0 %v341
        %v386 = vpop.xlane.xlu0 %385
        %387 = vadd.xlane.f32.xlu0 %v342
        %v388 = vpop.xlane.xlu0 %387
        %389 = vadd.xlane.f32.xlu0 %v343
        %v390 = vpop.xlane.xlu0 %389
        %391 = vadd.xlane.f32.xlu0 %v344
        %v392 = vpop.xlane.xlu0 %391
        %v393 = vadd.f32 %v345, %v362
        %v394 = vadd.f32 %v346, %v364
        %v395 = vadd.f32 %v347, %v366
        %v396 = vadd.f32 %v348, %v368
        %v397 = vadd.f32 %v349, %v370
        %v398 = vadd.f32 %v350, %v372
        %v399 = vadd.f32 %v351, %v374
        %v400 = vadd.f32 %v352, %v376
        %v401 = vadd.f32 %v353, %v378
        %v402 = vadd.f32 %v354, %v380
        %v403 = vadd.f32 %v355, %v382
        %v404 = vadd.f32 %v356, %v384
        %v405 = vadd.f32 %v357, %v386
        %v406 = vadd.f32 %v358, %v388
        %v407 = vadd.f32 %v359, %v390
        %v408 = vadd.f32 %v360, %v392
        %vm409 = vcmask 7168
        %410 = vst.msk [vmem:[#allocation3] sm:$0xff] %vm409, %v393
        %411 = vst.msk [vmem:[#allocation3 + $0x8] sm:$0xff] %vm409, %v394
        %412 = vst.msk [vmem:[#allocation3 + $0x10] sm:$0xff] %vm409, %v395
        %413 = vst.msk [vmem:[#allocation3 + $0x18] sm:$0xff] %vm409, %v396
        %414 = vst.msk [vmem:[#allocation3 + $0x20] sm:$0xff] %vm409, %v397
        %415 = vst.msk [vmem:[#allocation3 + $0x28] sm:$0xff] %vm409, %v398
        %416 = vst.msk [vmem:[#allocation3 + $0x30] sm:$0xff] %vm409, %v399
        %417 = vst.msk [vmem:[#allocation3 + $0x38] sm:$0xff] %vm409, %v400
        %418 = vst.msk [vmem:[#allocation3 + $0x40] sm:$0xff] %vm409, %v401
        %419 = vst.msk [vmem:[#allocation3 + $0x48] sm:$0xff] %vm409, %v402
        %420 = vst.msk [vmem:[#allocation3 + $0x50] sm:$0xff] %vm409, %v403
        %421 = vst.msk [vmem:[#allocation3 + $0x58] sm:$0xff] %vm409, %v404
        %422 = vst.msk [vmem:[#allocation3 + $0x60] sm:$0xff] %vm409, %v405
        %423 = vst.msk [vmem:[#allocation3 + $0x68] sm:$0xff] %vm409, %v406
        %424 = vst.msk [vmem:[#allocation3 + $0x70] sm:$0xff] %vm409, %v407
        %425 = vst.msk [vmem:[#allocation3 + $0x78] sm:$0xff] %vm409, %v408
        %v426 = vld [vmem:[#allocation2] sm:$0xff]
        %v427 = vld [vmem:[#allocation2 + $0x8] sm:$0xff]
        %v428 = vld [vmem:[#allocation2 + $0x10] sm:$0xff]
        %v429 = vld [vmem:[#allocation2 + $0x18] sm:$0xff]
        %v430 = vld [vmem:[#allocation2 + $0x20] sm:$0xff]
        %v431 = vld [vmem:[#allocation2 + $0x28] sm:$0xff]
        %v432 = vld [vmem:[#allocation2 + $0x30] sm:$0xff]
        %v433 = vld [vmem:[#allocation2 + $0x38] sm:$0xff]
        %v434 = vld [vmem:[#allocation2 + $0x40] sm:$0xff]
        %v435 = vld [vmem:[#allocation2 + $0x48] sm:$0xff]
        %v436 = vld [vmem:[#allocation2 + $0x50] sm:$0xff]
        %v437 = vld [vmem:[#allocation2 + $0x58] sm:$0xff]
        %v438 = vld [vmem:[#allocation2 + $0x60] sm:$0xff]
        %v439 = vld [vmem:[#allocation2 + $0x68] sm:$0xff]
        %v440 = vld [vmem:[#allocation2 + $0x70] sm:$0xff]
        %v441 = vld [vmem:[#allocation2 + $0x78] sm:$0xff]
        %v442 = vld [vmem:[%s192] sm:$0xff]
        %v443 = vld [vmem:[%s192 + $0x8] sm:$0xff]
        %v444 = vld [vmem:[%s192 + $0x10] sm:$0xff]
        %v445 = vld [vmem:[%s192 + $0x18] sm:$0xff]
        %v446 = vld [vmem:[%s192 + $0x20] sm:$0xff]
        %v447 = vld [vmem:[%s192 + $0x28] sm:$0xff]
        %v448 = vld [vmem:[%s192 + $0x30] sm:$0xff]
        %v449 = vld [vmem:[%s192 + $0x38] sm:$0xff]
        %v450 = vld [vmem:[%s192 + $0x40] sm:$0xff]
        %v451 = vld [vmem:[%s192 + $0x48] sm:$0xff]
        %v452 = vld [vmem:[%s192 + $0x50] sm:$0xff]
        %v453 = vld [vmem:[%s192 + $0x58] sm:$0xff]
        %v454 = vld [vmem:[%s192 + $0x60] sm:$0xff]
        %v455 = vld [vmem:[%s192 + $0x68] sm:$0xff]
        %v456 = vld [vmem:[%s192 + $0x70] sm:$0xff]
        %v457 = vld [vmem:[%s192 + $0x78] sm:$0xff]
        %458 = vmatprep.subr.mxu0 0.0
        %459 = vmatpush1.msra.mxu0 %v442
        %460 = vmatprep.subr.mxu0 0.0
        %461 = vmatpush1.msra.mxu0 %v443
        %462 = vmatprep.subr.mxu0 0.0
        %463 = vmatpush1.msra.mxu0 %v444
        %464 = vmatprep.subr.mxu0 0.0
        %465 = vmatpush1.msra.mxu0 %v445
        %466 = vmatprep.subr.mxu0 0.0
        %467 = vmatpush1.msra.mxu0 %v446
        %468 = vmatprep.subr.mxu0 0.0
        %469 = vmatpush1.msra.mxu0 %v447
        %470 = vmatprep.subr.mxu0 0.0
        %471 = vmatpush1.msra.mxu0 %v448
        %472 = vmatprep.subr.mxu0 0.0
        %473 = vmatpush1.msra.mxu0 %v449
        %474 = vmatprep.subr.mxu0 0.0
        %475 = vmatpush1.msra.mxu0 %v450
        %476 = vmatprep.subr.mxu0 0.0
        %477 = vmatpush1.msra.mxu0 %v451
        %478 = vmatprep.subr.mxu0 0.0
        %479 = vmatpush1.msra.mxu0 %v452
        %480 = vmatprep.subr.mxu0 0.0
        %481 = vmatpush1.msra.mxu0 %v453
        %482 = vmatprep.subr.mxu0 0.0
        %483 = vmatpush1.msra.mxu0 %v454
        %484 = vmatprep.subr.mxu0 0.0
        %485 = vmatpush1.msra.mxu0 %v455
        %486 = vmatprep.subr.mxu0 0.0
        %487 = vmatpush1.msra.mxu0 %v456
        %488 = vmatprep.subr.mxu0 0.0
        %489 = vmatpush1.msra.mxu0 %v457
        %490 = vmatprep.subr.mxu0 0.0
        %491 = vmatpush1.msra.mxu0 0.0
        %492 = vmatprep.subr.mxu0 0.0
        %493 = vmatpush1.msra.mxu0 0.0
        %494 = vmatprep.subr.mxu0 0.0
        %495 = vmatpush1.msra.mxu0 0.0
        %496 = vmatprep.subr.mxu0 0.0
        %497 = vmatpush1.msra.mxu0 0.0
        %498 = vmatprep.subr.mxu0 0.0
        %499 = vmatpush1.msra.mxu0 0.0
        %500 = vmatprep.subr.mxu0 0.0
        %501 = vmatpush1.msra.mxu0 0.0
        %502 = vmatprep.subr.mxu0 0.0
        %503 = vmatpush1.msra.mxu0 0.0
        %504 = vmatprep.subr.mxu0 0.0
        %505 = vmatpush1.msra.mxu0 0.0
        %506 = vmatprep.subr.mxu0 0.0
        %507 = vmatpush1.msra.mxu0 0.0
        %508 = vmatprep.subr.mxu0 0.0
        %509 = vmatpush1.msra.mxu0 0.0
        %510 = vmatprep.subr.mxu0 0.0
        %511 = vmatpush1.msra.mxu0 0.0
        %512 = vmatprep.subr.mxu0 0.0
        %513 = vmatpush1.msra.mxu0 0.0
        %514 = vmatprep.subr.mxu0 0.0
        %515 = vmatpush1.msra.mxu0 0.0
        %516 = vmatprep.subr.mxu0 0.0
        %517 = vmatpush1.msra.mxu0 0.0
        %518 = vmatprep.subr.mxu0 0.0
        %519 = vmatpush1.msra.mxu0 0.0
        %520 = vmatprep.subr.mxu0 0.0
        %521 = vmatpush1.msra.mxu0 0.0
        %522 = vmatprep.mubr.f32.mxu0 0.0
        %523 = vmatmul.mubr.f32.gmra.mrb[0].mxu0 %v329
        %v524 = vpop.f32.mrb[0].mxu0
        %v525 = vadd.f32 0.0, %v524
        %v526 = vpop.f32.mrb[0].mxu0
        %527 = vmatprep.mubr.f32.mxu0 0.0
        %528 = vmatmul.mubr.f32.gmra.mrb[0].mxu0 %v330
        %v529 = vpop.f32.mrb[0].mxu0
        %v530 = vadd.f32 0.0, %v529
        %v531 = vpop.f32.mrb[0].mxu0
        %532 = vmatprep.mubr.f32.mxu0 0.0
        %533 = vmatmul.mubr.f32.gmra.mrb[0].mxu0 %v331
        %v534 = vpop.f32.mrb[0].mxu0
        %v535 = vadd.f32 0.0, %v534
        %v536 = vpop.f32.mrb[0].mxu0
        %537 = vmatprep.mubr.f32.mxu0 0.0
        %538 = vmatmul.mubr.f32.gmra.mrb[0].mxu0 %v332
        %v539 = vpop.f32.mrb[0].mxu0
        %v540 = vadd.f32 0.0, %v539
        %v541 = vpop.f32.mrb[0].mxu0
        %542 = vmatprep.mubr.f32.mxu0 0.0
        %543 = vmatmul.mubr.f32.gmra.mrb[0].mxu0 %v333
        %v544 = vpop.f32.mrb[0].mxu0
        %v545 = vadd.f32 0.0, %v544
        %v546 = vpop.f32.mrb[0].mxu0
        %547 = vmatprep.mubr.f32.mxu0 0.0
        %548 = vmatmul.mubr.f32.gmra.mrb[0].mxu0 %v334
        %v549 = vpop.f32.mrb[0].mxu0
        %v550 = vadd.f32 0.0, %v549
        %v551 = vpop.f32.mrb[0].mxu0
        %552 = vmatprep.mubr.f32.mxu0 0.0
        %553 = vmatmul.mubr.f32.gmra.mrb[0].mxu0 %v335
        %v554 = vpop.f32.mrb[0].mxu0
        %v555 = vadd.f32 0.0, %v554
        %v556 = vpop.f32.mrb[0].mxu0
        %557 = vmatprep.mubr.f32.mxu0 0.0
        %558 = vmatmul.mubr.f32.gmra.mrb[0].mxu0 %v336
        %v559 = vpop.f32.mrb[0].mxu0
        %v560 = vadd.f32 0.0, %v559
        %v561 = vpop.f32.mrb[0].mxu0
        %562 = vmatprep.mubr.f32.mxu0 0.0
        %563 = vmatmul.mubr.f32.gmra.mrb[0].mxu0 %v337
        %v564 = vpop.f32.mrb[0].mxu0
        %v565 = vadd.f32 0.0, %v564
        %v566 = vpop.f32.mrb[0].mxu0
        %567 = vmatprep.mubr.f32.mxu0 0.0
        %568 = vmatmul.mubr.f32.gmra.mrb[0].mxu0 %v338
        %v569 = vpop.f32.mrb[0].mxu0
        %v570 = vadd.f32 0.0, %v569
        %v571 = vpop.f32.mrb[0].mxu0
        %572 = vmatprep.mubr.f32.mxu0 0.0
        %573 = vmatmul.mubr.f32.gmra.mrb[0].mxu0 %v339
        %v574 = vpop.f32.mrb[0].mxu0
        %v575 = vadd.f32 0.0, %v574
        %v576 = vpop.f32.mrb[0].mxu0
        %577 = vmatprep.mubr.f32.mxu0 0.0
        %578 = vmatmul.mubr.f32.gmra.mrb[0].mxu0 %v340
        %v579 = vpop.f32.mrb[0].mxu0
        %v580 = vadd.f32 0.0, %v579
        %v581 = vpop.f32.mrb[0].mxu0
        %582 = vmatprep.mubr.f32.mxu0 0.0
        %583 = vmatmul.mubr.f32.gmra.mrb[0].mxu0 %v341
        %v584 = vpop.f32.mrb[0].mxu0
        %v585 = vadd.f32 0.0, %v584
        %v586 = vpop.f32.mrb[0].mxu0
        %587 = vmatprep.mubr.f32.mxu0 0.0
        %588 = vmatmul.mubr.f32.gmra.mrb[0].mxu0 %v342
        %v589 = vpop.f32.mrb[0].mxu0
        %v590 = vadd.f32 0.0, %v589
        %v591 = vpop.f32.mrb[0].mxu0
        %592 = vmatprep.mubr.f32.mxu0 0.0
        %593 = vmatmul.mubr.f32.gmra.mrb[0].mxu0 %v343
        %v594 = vpop.f32.mrb[0].mxu0
        %v595 = vadd.f32 0.0, %v594
        %v596 = vpop.f32.mrb[0].mxu0
        %597 = vmatprep.mubr.f32.mxu0 0.0
        %598 = vmatmul.mubr.f32.gmra.mrb[0].mxu0 %v344
        %v599 = vpop.f32.mrb[0].mxu0
        %v600 = vadd.f32 0.0, %v599
        %v601 = vpop.f32.mrb[0].mxu0
        %602 = vdwg.mxu0
        %v603 = vadd.f32 %v426, %v525
        %v604 = vadd.f32 %v427, %v530
        %v605 = vadd.f32 %v428, %v535
        %v606 = vadd.f32 %v429, %v540
        %v607 = vadd.f32 %v430, %v545
        %v608 = vadd.f32 %v431, %v550
        %v609 = vadd.f32 %v432, %v555
        %v610 = vadd.f32 %v433, %v560
        %v611 = vadd.f32 %v434, %v565
        %v612 = vadd.f32 %v435, %v570
        %v613 = vadd.f32 %v436, %v575
        %v614 = vadd.f32 %v437, %v580
        %v615 = vadd.f32 %v438, %v585
        %v616 = vadd.f32 %v439, %v590
        %v617 = vadd.f32 %v440, %v595
        %v618 = vadd.f32 %v441, %v600
        %619 = vst [vmem:[#allocation2] sm:$0xff] %v603
        %620 = vst [vmem:[#allocation2 + $0x8] sm:$0xff] %v604
        %621 = vst [vmem:[#allocation2 + $0x10] sm:$0xff] %v605
        %622 = vst [vmem:[#allocation2 + $0x18] sm:$0xff] %v606
        %623 = vst [vmem:[#allocation2 + $0x20] sm:$0xff] %v607
        %624 = vst [vmem:[#allocation2 + $0x28] sm:$0xff] %v608
        %625 = vst [vmem:[#allocation2 + $0x30] sm:$0xff] %v609
        %626 = vst [vmem:[#allocation2 + $0x38] sm:$0xff] %v610
        %627 = vst [vmem:[#allocation2 + $0x40] sm:$0xff] %v611
        %628 = vst [vmem:[#allocation2 + $0x48] sm:$0xff] %v612
        %629 = vst [vmem:[#allocation2 + $0x50] sm:$0xff] %v613
        %630 = vst [vmem:[#allocation2 + $0x58] sm:$0xff] %v614
        %631 = vst [vmem:[#allocation2 + $0x60] sm:$0xff] %v615
        %632 = vst [vmem:[#allocation2 + $0x68] sm:$0xff] %v616
        %633 = vst [vmem:[#allocation2 + $0x70] sm:$0xff] %v617
        %634 = vst [vmem:[#allocation2 + $0x78] sm:$0xff] %v618
        %p635 = scmp.eq.s32.totalorder %s27, 1
        // Predicated region
        $region41: #{tpu_custom_call.1} parent=27 // pred_check
          %p636 = pneg %p635
        $region42: #{tpu_custom_call.1} parent=27 // pred_check_branch
          %638 = sbr.rel (%p636) target = $region44
        $region43: #{tpu_custom_call.1} parent=27 // pred_region
          %v639 = vld [vmem:[#allocation3] sm:$0xff]
          %v640 = vld [vmem:[#allocation3 + $0x8] sm:$0xff]
          %v641 = vld [vmem:[#allocation3 + $0x10] sm:$0xff]
          %v642 = vld [vmem:[#allocation3 + $0x18] sm:$0xff]
          %v643 = vld [vmem:[#allocation3 + $0x20] sm:$0xff]
          %v644 = vld [vmem:[#allocation3 + $0x28] sm:$0xff]
          %v645 = vld [vmem:[#allocation3 + $0x30] sm:$0xff]
          %v646 = vld [vmem:[#allocation3 + $0x38] sm:$0xff]
          %v647 = vld [vmem:[#allocation3 + $0x40] sm:$0xff]
          %v648 = vld [vmem:[#allocation3 + $0x48] sm:$0xff]
          %v649 = vld [vmem:[#allocation3 + $0x50] sm:$0xff]
          %v650 = vld [vmem:[#allocation3 + $0x58] sm:$0xff]
          %v651 = vld [vmem:[#allocation3 + $0x60] sm:$0xff]
          %v652 = vld [vmem:[#allocation3 + $0x68] sm:$0xff]
          %v653 = vld [vmem:[#allocation3 + $0x70] sm:$0xff]
          %v654 = vld [vmem:[#allocation3 + $0x78] sm:$0xff]
          %v655 = vmax.f32 %v639, 1.0
          %v656 = vmax.f32 %v640, 1.0
          %v657 = vmax.f32 %v641, 1.0
          %v658 = vmax.f32 %v642, 1.0
          %v659 = vmax.f32 %v643, 1.0
          %v660 = vmax.f32 %v644, 1.0
          %v661 = vmax.f32 %v645, 1.0
          %v662 = vmax.f32 %v646, 1.0
          %v663 = vmax.f32 %v647, 1.0
          %v664 = vmax.f32 %v648, 1.0
          %v665 = vmax.f32 %v649, 1.0
          %v666 = vmax.f32 %v650, 1.0
          %v667 = vmax.f32 %v651, 1.0
          %v668 = vmax.f32 %v652, 1.0
          %v669 = vmax.f32 %v653, 1.0
          %v670 = vmax.f32 %v654, 1.0
          %v671 = vrcp.pop %v655
          %v672 = vrcp.pop %v656
          %v673 = vrcp.pop %v657
          %v674 = vrcp.pop %v658
          %v675 = vrcp.pop %v659
          %v676 = vrcp.pop %v660
          %v677 = vrcp.pop %v661
          %v678 = vrcp.pop %v662
          %v679 = vrcp.pop %v663
          %v680 = vrcp.pop %v664
          %v681 = vrcp.pop %v665
          %v682 = vrcp.pop %v666
          %v683 = vrcp.pop %v667
          %v684 = vrcp.pop %v668
          %v685 = vrcp.pop %v669
          %v686 = vrcp.pop %v670
          %v687 = vld [vmem:[#allocation2] sm:$0xff]
          %v688 = vld [vmem:[#allocation2 + $0x8] sm:$0xff]
          %v689 = vld [vmem:[#allocation2 + $0x10] sm:$0xff]
          %v690 = vld [vmem:[#allocation2 + $0x18] sm:$0xff]
          %v691 = vld [vmem:[#allocation2 + $0x20] sm:$0xff]
          %v692 = vld [vmem:[#allocation2 + $0x28] sm:$0xff]
          %v693 = vld [vmem:[#allocation2 + $0x30] sm:$0xff]
          %v694 = vld [vmem:[#allocation2 + $0x38] sm:$0xff]
          %v695 = vld [vmem:[#allocation2 + $0x40] sm:$0xff]
          %v696 = vld [vmem:[#allocation2 + $0x48] sm:$0xff]
          %v697 = vld [vmem:[#allocation2 + $0x50] sm:$0xff]
          %v698 = vld [vmem:[#allocation2 + $0x58] sm:$0xff]
          %v699 = vld [vmem:[#allocation2 + $0x60] sm:$0xff]
          %v700 = vld [vmem:[#allocation2 + $0x68] sm:$0xff]
          %v701 = vld [vmem:[#allocation2 + $0x70] sm:$0xff]
          %v702 = vld [vmem:[#allocation2 + $0x78] sm:$0xff]
          %704 = vset.pattern.permute.xlu0 0
          %705 = vperm.xlu0 %704, %v671
          %v706 = vpop.permute.xlu0 %705
          %709 = vset.pattern.permute.xlu0 0
          %710 = vperm.xlu0 %709, %v672
          %v711 = vpop.permute.xlu0 %710
          %714 = vset.pattern.permute.xlu0 0
          %715 = vperm.xlu0 %714, %v673
          %v716 = vpop.permute.xlu0 %715
          %719 = vset.pattern.permute.xlu0 0
          %720 = vperm.xlu0 %719, %v674
          %v721 = vpop.permute.xlu0 %720
          %724 = vset.pattern.permute.xlu0 0
          %725 = vperm.xlu0 %724, %v675
          %v726 = vpop.permute.xlu0 %725
          %729 = vset.pattern.permute.xlu0 0
          %730 = vperm.xlu0 %729, %v676
          %v731 = vpop.permute.xlu0 %730
          %734 = vset.pattern.permute.xlu0 0
          %735 = vperm.xlu0 %734, %v677
          %v736 = vpop.permute.xlu0 %735
          %739 = vset.pattern.permute.xlu0 0
          %740 = vperm.xlu0 %739, %v678
          %v741 = vpop.permute.xlu0 %740
          %744 = vset.pattern.permute.xlu0 0
          %745 = vperm.xlu0 %744, %v679
          %v746 = vpop.permute.xlu0 %745
          %749 = vset.pattern.permute.xlu0 0
          %750 = vperm.xlu0 %749, %v680
          %v751 = vpop.permute.xlu0 %750
          %754 = vset.pattern.permute.xlu0 0
          %755 = vperm.xlu0 %754, %v681
          %v756 = vpop.permute.xlu0 %755
          %759 = vset.pattern.permute.xlu0 0
          %760 = vperm.xlu0 %759, %v682
          %v761 = vpop.permute.xlu0 %760
          %764 = vset.pattern.permute.xlu0 0
          %765 = vperm.xlu0 %764, %v683
          %v766 = vpop.permute.xlu0 %765
          %769 = vset.pattern.permute.xlu0 0
          %770 = vperm.xlu0 %769, %v684
          %v771 = vpop.permute.xlu0 %770
          %774 = vset.pattern.permute.xlu0 0
          %775 = vperm.xlu0 %774, %v685
          %v776 = vpop.permute.xlu0 %775
          %779 = vset.pattern.permute.xlu0 0
          %780 = vperm.xlu0 %779, %v686
          %v781 = vpop.permute.xlu0 %780
          %v783 = vmul.f32 %v687, %v706
          %v784 = vmul.f32 %v688, %v711
          %v785 = vmul.f32 %v689, %v716
          %v786 = vmul.f32 %v690, %v721
          %v787 = vmul.f32 %v691, %v726
          %v788 = vmul.f32 %v692, %v731
          %v789 = vmul.f32 %v693, %v736
          %v790 = vmul.f32 %v694, %v741
          %v791 = vmul.f32 %v695, %v746
          %v792 = vmul.f32 %v696, %v751
          %v793 = vmul.f32 %v697, %v756
          %v794 = vmul.f32 %v698, %v761
          %v795 = vmul.f32 %v699, %v766
          %v796 = vmul.f32 %v700, %v771
          %v797 = vmul.f32 %v701, %v776
          %v798 = vmul.f32 %v702, %v781
          %799 = vst [vmem:[%s217] sm:$0xff] %v783
          %800 = vst [vmem:[%s217 + $0x8] sm:$0xff] %v784
          %801 = vst [vmem:[%s217 + $0x10] sm:$0xff] %v785
          %802 = vst [vmem:[%s217 + $0x18] sm:$0xff] %v786
          %803 = vst [vmem:[%s217 + $0x20] sm:$0xff] %v787
          %804 = vst [vmem:[%s217 + $0x28] sm:$0xff] %v788
          %805 = vst [vmem:[%s217 + $0x30] sm:$0xff] %v789
          %806 = vst [vmem:[%s217 + $0x38] sm:$0xff] %v790
          %807 = vst [vmem:[%s217 + $0x40] sm:$0xff] %v791
          %808 = vst [vmem:[%s217 + $0x48] sm:$0xff] %v792
          %809 = vst [vmem:[%s217 + $0x50] sm:$0xff] %v793
          %810 = vst [vmem:[%s217 + $0x58] sm:$0xff] %v794
          %811 = vst [vmem:[%s217 + $0x60] sm:$0xff] %v795
          %812 = vst [vmem:[%s217 + $0x68] sm:$0xff] %v796
          %813 = vst [vmem:[%s217 + $0x70] sm:$0xff] %v797
          %814 = vst [vmem:[%s217 + $0x78] sm:$0xff] %v798
        $region44: #{tpu_custom_call.1} parent=27 // pred_fallthru
          _
        %s815 = sand.u32 %s96, 1
        %s816 = scalar_lea.sflag [#allocation6], %s815
        %s817 = sand.u32 %s96, 1
        %s818 = smul.addr %s817, 128
        %s819 = scalar_lea.vmem [#allocation9], %s818
        // Predicated region
        $region45: #{tpu_custom_call.1} parent=27 // pred_check
          %p820 = pneg %p106
        $region46: #{tpu_custom_call.1} parent=27 // pred_check_branch
          %822 = sbr.rel (%p820) target = $region48
        $region47: #{tpu_custom_call.1} parent=27 // pred_region
          %s823 = smul.u32 16, %s26
          %s825 = ssub.s32 2048, 2048
          %826 = vsyncadd %s816, %s825
          %s827 = smul.addr %s823, 128
          %s828 = scalar_lea.hbm %s2, %s827
          %s829 = sshll.u32 %s819, 4
          %s830 = int_to_ptr.vmem [resolvable:$true] %s829
          %835 = dma.vmem_to_hbm [thread:$0]  %s830, 2048, %s828, %s816, 128, 128, 8
        $region48: #{tpu_custom_call.1} parent=27 // pred_fallthru
          _
      $region28: #{tpu_custom_call.1} parent=5 // pred_fallthru
        _
      %p836 = scmp.le.s32.totalorder 2, %s17
      // Predicated region
      $region49: #{tpu_custom_call.1} parent=5 // pred_check
        %p837 = pneg %p836
      $region50: #{tpu_custom_call.1} parent=5 // pred_check_branch
        %839 = sbr.rel (%p837) target = $region52
      $region51: #{tpu_custom_call.1} parent=5 // pred_region
        %s840 = ssub.s32 %s17, 2
        // Predicated region
        $region53: #{tpu_custom_call.1} parent=51 // pred_check
          %p841 = pneg %p112
        $region54: #{tpu_custom_call.1} parent=51 // pred_check_branch
          %843 = sbr.rel (%p841) target = $region56
        $region55: #{tpu_custom_call.1} parent=51 // pred_region
          %s844 = sand.u32 %s97, 1
          %s845 = scalar_lea.sflag [#allocation6], %s844
          %s846 = sand.u32 %s97, 1
          %s847 = smul.addr %s846, 128
          %s848 = scalar_lea.vmem [#allocation9], %s847
          %849 = dma.done %s845, 2048
        $region56: #{tpu_custom_call.1} parent=51 // pred_fallthru
          _
      $region52: #{tpu_custom_call.1} parent=5 // pred_fallthru
        _
    $region6: #{tpu_custom_call.1} parent=1 // loop_footer
      %s21 = sadd.s32 1, %s17
    $region7: #{tpu_custom_call.1} parent=1 // loop_footer_branch
      %16 = sbr.rel target = $region3
    $region8: #{tpu_custom_call.1} parent=1 // loop_exit
      _
    %850 = vsyncpa [#allocation5], 1
    %s851 = scalar_lea.sflag [#allocation5], 1
    %852 = vsyncpa %s851, 1
    %853 = vsyncpa [#allocation8], 1
    %s854 = scalar_lea.sflag [#allocation8], 1
    %855 = vsyncpa %s854, 1
    %856 = vsyncpa [#allocation6], 1
    %s857 = scalar_lea.sflag [#allocation6], 1
    %858 = vsyncpa %s857, 1

</llo_original>
